<compile_context>
chip_gen: v7x
topology: tpu7x:2x2x1
jax: 0.10.0
libtpu: 0.0.40
codegen_flags: <defaults>
</compile_context>

<pallas_src>
import jax
import jax.numpy as jnp
from jax.experimental import pallas as pl
from jax.experimental.pallas import tpu as pltpu


def _ce_skel_kernel(logits_ref, tgt_ref, skel_ref, acc_ref):
    """One grid step: logits (C, TM, 128), tgt/skel (TM, 128) for one batch element.
    Accumulates ce * skel into a dense (TM, 128) resident accumulator tile."""
    ji = pl.program_id(2)

    @pl.when(ji == 0)
    def _():
        acc_ref[...] = jnp.zeros_like(acc_ref)

    C = logits_ref.shape[0]
    tgt = tgt_ref[...]                                   # (TM, 128) int32

    # Pass 1 (fused): running channel max + target-class select, in the input dtype
    # (halves VPU work for bf16 inputs on v6e/v7x; plain f32 otherwise).
    # TODO(synk): PyTorch CrossEntropyLoss default ignore_index=-100 is not handled
    # (targets are assumed to be valid class indices; invalid targets give sel=0).
    x0 = logits_ref[0]                                   # (TM, 128)
    m = x0
    sel = jnp.where(tgt == 0, x0, jnp.zeros_like(x0))
    for c in range(1, C):
        xc = logits_ref[c]
        m = jnp.maximum(m, xc)
        sel = jnp.where(tgt == c, xc, sel)
    m = m.astype(jnp.float32)

    # Pass 2: numerically-stable exp-sum over channels in f32.
    s = jnp.exp(logits_ref[0].astype(jnp.float32) - m)
    for c in range(1, C):
        s = s + jnp.exp(logits_ref[c].astype(jnp.float32) - m)

    lse = jnp.log(s) + m                                 # logsumexp, (TM, 128)
    ce = lse - sel.astype(jnp.float32)                   # per-pixel cross entropy
    acc_ref[...] += ce * skel_ref[...].astype(jnp.float32)


def _round_up(x, m):
    return ((x + m - 1) // m) * m


def _plan_tiles(C, HW, logit_bytes, tgt_bytes, skel_bytes,
                in_budget_bytes=8 * 1024 * 1024, tm_max=512):
    """Pick (TM, J_outer, J_inner, P_pad).  Pixels are rows of 128 lanes; each grid
    step processes TM rows (TM*128 pixels).  TM is sized so double-buffered inputs
    fit the byte budget (safe for v5e/v6e/v7x VMEM); the row-blocks are split into
    an outer parallel factor (megacore) and an inner reduction factor."""
    per_row_bytes = 128 * (C * logit_bytes + tgt_bytes + skel_bytes)
    tm_cap = (in_budget_bytes // (2 * per_row_bytes) // 32) * 32
    tm_cap = max(32, min(tm_cap, tm_max))

    p_raw = pl.cdiv(HW, 128)                 # pixel rows needed
    if p_raw <= tm_cap:
        tm = _round_up(p_raw, 8)             # block == full dim; keep sublane-dense
        j_outer, j_inner = 1, 1
    else:
        tm = tm_cap
        nblk = pl.cdiv(p_raw, tm)
        j_outer = 2 if nblk >= 2 else 1
        j_inner = pl.cdiv(nblk, j_outer)
    p_pad = tm * j_outer * j_inner
    return tm, j_outer, j_inner, p_pad


def ce_skeldistance_loss(net_output, target, skel):
    """net_output: (B, C, H, W) float (any dtype); target: (B, 1, H, W) int;
    skel: (B, H, W) or (B, 1, H, W) float.
    Returns scalar mean(CE(net_output, target[:,0]) * skel)."""
    B, C, H, W = net_output.shape
    HW = H * W
    N = B * HW

    if target.dtype != jnp.int32:            # only pay the cast if needed
        target = target.astype(jnp.int32)
    if skel.ndim == 4 and skel.shape[1] == 1:
        skel = skel[:, 0]

    logit_bytes = jnp.dtype(net_output.dtype).itemsize
    skel_bytes = jnp.dtype(skel.dtype).itemsize
    tm, j_outer, j_inner, p_pad = _plan_tiles(C, HW, logit_bytes, 4, skel_bytes)
    hw_pad = p_pad * 128

    # Free, contiguous reshapes; pad only when HW isn't a tile multiple.
    logits = net_output.reshape(B, C, HW)
    tgt = target.reshape(B, HW)
    skl = skel.reshape(B, HW)
    if hw_pad != HW:
        pad = hw_pad - HW
        logits = jnp.pad(logits, ((0, 0), (0, 0), (0, pad)))   # finite zeros
        tgt = jnp.pad(tgt, ((0, 0), (0, pad)))                  # class 0
        skl = jnp.pad(skl, ((0, 0), (0, pad)))                  # weight 0 -> no contribution

    logits = logits.reshape(B, C, p_pad, 128)
    tgt = tgt.reshape(B, p_pad, 128)
    skl = skl.reshape(B, p_pad, 128)

    grid = (B, j_outer, j_inner)

    partial = pl.pallas_call(
        _ce_skel_kernel,
        out_shape=jax.ShapeDtypeStruct((B, j_outer, tm, 128), jnp.float32),
        grid_spec=pltpu.PrefetchScalarGridSpec(
            num_scalar_prefetch=0,
            grid=grid,
            in_specs=[
                pl.BlockSpec((pl.Squeezed(), C, tm, 128),
                             lambda b, jo, ji: (b, 0, jo * j_inner + ji, 0)),
                pl.BlockSpec((pl.Squeezed(), tm, 128),
                             lambda b, jo, ji: (b, jo * j_inner + ji, 0)),
                pl.BlockSpec((pl.Squeezed(), tm, 128),
                             lambda b, jo, ji: (b, jo * j_inner + ji, 0)),
            ],
            # dense per-(b, j_outer) accumulator tile, resident across the inner
            # reduction axis ji; reduced to a scalar once in the wrapper.
            out_specs=pl.BlockSpec((pl.Squeezed(), pl.Squeezed(), tm, 128),
                                   lambda b, jo, ji: (b, jo, 0, 0)),
        ),
        compiler_params=pltpu.CompilerParams(
            # (batch, outer-pixel) can shard across TensorCores; ji is the reduction.
            dimension_semantics=("parallel", "parallel", "arbitrary"),
            vmem_limit_bytes=32 * 1024 * 1024,   # explicit: safe on v5e/v6e/v7x
        ),
    )(logits, tgt, skl)

    return (jnp.sum(partial) / jnp.float32(N)).astype(jnp.float32)


def _reference(net_output, target, skel):
    # plain-JAX reference of the PyTorch forward
    logp = jax.nn.log_softmax(net_output.astype(jnp.float32), axis=1)   # (B,C,H,W)
    tgt = target[:, 0].astype(jnp.int32)                                # (B,H,W)
    ce = -jnp.take_along_axis(logp, tgt[:, None], axis=1)[:, 0]         # (B,H,W)
    return jnp.mean(ce * skel.astype(jnp.float32))


if __name__ == "__main__":
    key = jax.random.PRNGKey(0)
    k1, k2, k3 = jax.random.split(key, 3)

    B, C, H, W = 2, 4, 16, 16
    net_output = jax.random.normal(k1, (B, C, H, W), dtype=jnp.float32)
    target = jax.random.randint(k2, (B, 1, H, W), 0, C, dtype=jnp.int32)
    skel = jax.random.uniform(k3, (B, H, W), dtype=jnp.float32) * 2.0

    loss = ce_skeldistance_loss(net_output, target, skel)
    loss = jax.block_until_ready(loss)

    ref = _reference(net_output, target, skel)
    assert jnp.allclose(loss, ref, rtol=1e-5, atol=1e-5), (loss, ref)

    print("KERNEL_OK")
</pallas_src>

<mosaic_0001>
module attributes {stable_mosaic.version = 11 : i64} {
  func.func @_ce_skel_kernel(%arg0: i32, %arg1: i32, %arg2: i32, %arg3: memref<1x4x8x128xf32, #tpu.memory_space<vmem>>, %arg4: memref<1x8x128xi32, #tpu.memory_space<vmem>>, %arg5: memref<1x8x128xf32, #tpu.memory_space<vmem>>, %arg6: memref<1x1x8x128xf32, #tpu.memory_space<vmem>>) attributes {dimension_semantics = [#tpu.dimension_semantics<parallel>, #tpu.dimension_semantics<parallel>, #tpu.dimension_semantics<arbitrary>], iteration_bounds = array<i64: 2, 1, 1>, scalar_prefetch = 0 : i64, scratch_operands = 0 : i64, tpu.core_type = #tpu.core_type<tc>, window_params = [{transform_indices = @transform_0, window_bounds = array<i64: 1, 4, 8, 128>}, {transform_indices = @transform_1, window_bounds = array<i64: 1, 8, 128>}, {transform_indices = @transform_2, window_bounds = array<i64: 1, 8, 128>}, {transform_indices = @transform_3, window_bounds = array<i64: 1, 1, 8, 128>}]} {
    %c0_i32 = arith.constant 0 : i32
    %0 = arith.cmpi eq, %arg2, %c0_i32 : i32
    %1 = arith.extui %0 : i1 to i32
    %c0_i32_0 = arith.constant 0 : i32
    %2 = arith.cmpi ne, %1, %c0_i32_0 : i32
    scf.if %2 {
      %cst_44 = arith.constant 0.000000e+00 : f32
      %60 = vector.broadcast %cst_44 : f32 to vector<8x128xf32>
      %c0_45 = arith.constant 0 : index
      %c0_46 = arith.constant 0 : index
      %c0_47 = arith.constant 0 : index
      %c0_48 = arith.constant 0 : index
      %61 = vector.load %arg6[%c0_45, %c0_46, %c0_47, %c0_48] : memref<1x1x8x128xf32, #tpu.memory_space<vmem>>, vector<1x1x8x128xf32>
      %62 = vector.shape_cast %61 : vector<1x1x8x128xf32> to vector<8x128xf32>
      %63 = vector.shape_cast %60 : vector<8x128xf32> to vector<1x1x8x128xf32>
      tpu.vector_store %arg6[%c0_45, %c0_46, %c0_47, %c0_48], %63 {strides = array<i32>} : memref<1x1x8x128xf32, #tpu.memory_space<vmem>>, vector<1x1x8x128xf32>,
    } else {
    }
    %c0 = arith.constant 0 : index
    %c0_1 = arith.constant 0 : index
    %c0_2 = arith.constant 0 : index
    %3 = vector.load %arg4[%c0, %c0_1, %c0_2] : memref<1x8x128xi32, #tpu.memory_space<vmem>>, vector<1x8x128xi32>
    %4 = vector.shape_cast %3 : vector<1x8x128xi32> to vector<8x128xi32>
    %c0_3 = arith.constant 0 : index
    %c0_4 = arith.constant 0 : index
    %c0_5 = arith.constant 0 : index
    %c0_6 = arith.constant 0 : index
    %5 = vector.load %arg3[%c0_3, %c0_4, %c0_5, %c0_6] : memref<1x4x8x128xf32, #tpu.memory_space<vmem>>, vector<1x1x8x128xf32>
    %6 = vector.shape_cast %5 : vector<1x1x8x128xf32> to vector<8x128xf32>
    %c0_i32_7 = arith.constant 0 : i32
    %7 = vector.broadcast %c0_i32_7 : i32 to vector<8x128xi32>
    %8 = arith.cmpi eq, %4, %7 : vector<8x128xi32>
    %cst = arith.constant 0.000000e+00 : f32
    %9 = vector.broadcast %cst : f32 to vector<8x128xf32>
    %10 = arith.select %8, %6, %9 : vector<8x128xi1>, vector<8x128xf32>
    %c0_8 = arith.constant 0 : index
    %c1 = arith.constant 1 : index
    %c0_9 = arith.constant 0 : index
    %c0_10 = arith.constant 0 : index
    %11 = vector.load %arg3[%c0_8, %c1, %c0_9, %c0_10] : memref<1x4x8x128xf32, #tpu.memory_space<vmem>>, vector<1x1x8x128xf32>
    %12 = vector.shape_cast %11 : vector<1x1x8x128xf32> to vector<8x128xf32>
    %13 = arith.maximumf %6, %12 : vector<8x128xf32>
    %c1_i32 = arith.constant 1 : i32
    %14 = vector.broadcast %c1_i32 : i32 to vector<8x128xi32>
    %15 = arith.cmpi eq, %4, %14 : vector<8x128xi32>
    %16 = arith.select %15, %12, %10 : vector<8x128xi1>, vector<8x128xf32>
    %c0_11 = arith.constant 0 : index
    %c2 = arith.constant 2 : index
    %c0_12 = arith.constant 0 : index
    %c0_13 = arith.constant 0 : index
    %17 = vector.load %arg3[%c0_11, %c2, %c0_12, %c0_13] : memref<1x4x8x128xf32, #tpu.memory_space<vmem>>, vector<1x1x8x128xf32>
    %18 = vector.shape_cast %17 : vector<1x1x8x128xf32> to vector<8x128xf32>
    %19 = arith.maximumf %13, %18 : vector<8x128xf32>
    %c2_i32 = arith.constant 2 : i32
    %20 = vector.broadcast %c2_i32 : i32 to vector<8x128xi32>
    %21 = arith.cmpi eq, %4, %20 : vector<8x128xi32>
    %22 = arith.select %21, %18, %16 : vector<8x128xi1>, vector<8x128xf32>
    %c0_14 = arith.constant 0 : index
    %c3 = arith.constant 3 : index
    %c0_15 = arith.constant 0 : index
    %c0_16 = arith.constant 0 : index
    %23 = vector.load %arg3[%c0_14, %c3, %c0_15, %c0_16] : memref<1x4x8x128xf32, #tpu.memory_space<vmem>>, vector<1x1x8x128xf32>
    %24 = vector.shape_cast %23 : vector<1x1x8x128xf32> to vector<8x128xf32>
    %25 = arith.maximumf %19, %24 : vector<8x128xf32>
    %c3_i32 = arith.constant 3 : i32
    %26 = vector.broadcast %c3_i32 : i32 to vector<8x128xi32>
    %27 = arith.cmpi eq, %4, %26 : vector<8x128xi32>
    %28 = arith.select %27, %24, %22 : vector<8x128xi1>, vector<8x128xf32>
    %c0_17 = arith.constant 0 : index
    %c0_18 = arith.constant 0 : index
    %c0_19 = arith.constant 0 : index
    %c0_20 = arith.constant 0 : index
    %29 = vector.load %arg3[%c0_17, %c0_18, %c0_19, %c0_20] : memref<1x4x8x128xf32, #tpu.memory_space<vmem>>, vector<1x1x8x128xf32>
    %30 = vector.shape_cast %29 : vector<1x1x8x128xf32> to vector<8x128xf32>
    %31 = arith.subf %30, %25 : vector<8x128xf32>
    %32 = math.exp %31 : vector<8x128xf32>
    %c0_21 = arith.constant 0 : index
    %c1_22 = arith.constant 1 : index
    %c0_23 = arith.constant 0 : index
    %c0_24 = arith.constant 0 : index
    %33 = vector.load %arg3[%c0_21, %c1_22, %c0_23, %c0_24] : memref<1x4x8x128xf32, #tpu.memory_space<vmem>>, vector<1x1x8x128xf32>
    %34 = vector.shape_cast %33 : vector<1x1x8x128xf32> to vector<8x128xf32>
    %35 = arith.subf %34, %25 : vector<8x128xf32>
    %36 = math.exp %35 : vector<8x128xf32>
    %37 = arith.addf %32, %36 : vector<8x128xf32>
    %c0_25 = arith.constant 0 : index
    %c2_26 = arith.constant 2 : index
    %c0_27 = arith.constant 0 : index
    %c0_28 = arith.constant 0 : index
    %38 = vector.load %arg3[%c0_25, %c2_26, %c0_27, %c0_28] : memref<1x4x8x128xf32, #tpu.memory_space<vmem>>, vector<1x1x8x128xf32>
    %39 = vector.shape_cast %38 : vector<1x1x8x128xf32> to vector<8x128xf32>
    %40 = arith.subf %39, %25 : vector<8x128xf32>
    %41 = math.exp %40 : vector<8x128xf32>
    %42 = arith.addf %37, %41 : vector<8x128xf32>
    %c0_29 = arith.constant 0 : index
    %c3_30 = arith.constant 3 : index
    %c0_31 = arith.constant 0 : index
    %c0_32 = arith.constant 0 : index
    %43 = vector.load %arg3[%c0_29, %c3_30, %c0_31, %c0_32] : memref<1x4x8x128xf32, #tpu.memory_space<vmem>>, vector<1x1x8x128xf32>
    %44 = vector.shape_cast %43 : vector<1x1x8x128xf32> to vector<8x128xf32>
    %45 = arith.subf %44, %25 : vector<8x128xf32>
    %46 = math.exp %45 : vector<8x128xf32>
    %47 = arith.addf %42, %46 : vector<8x128xf32>
    %48 = math.log %47 : vector<8x128xf32>
    %49 = arith.addf %48, %25 : vector<8x128xf32>
    %50 = arith.subf %49, %28 : vector<8x128xf32>
    %c0_33 = arith.constant 0 : index
    %c0_34 = arith.constant 0 : index
    %c0_35 = arith.constant 0 : index
    %c0_36 = arith.constant 0 : index
    %51 = vector.load %arg6[%c0_33, %c0_34, %c0_35, %c0_36] : memref<1x1x8x128xf32, #tpu.memory_space<vmem>>, vector<1x1x8x128xf32>
    %52 = vector.shape_cast %51 : vector<1x1x8x128xf32> to vector<8x128xf32>
    %c0_37 = arith.constant 0 : index
    %c0_38 = arith.constant 0 : index
    %c0_39 = arith.constant 0 : index
    %53 = vector.load %arg5[%c0_37, %c0_38, %c0_39] : memref<1x8x128xf32, #tpu.memory_space<vmem>>, vector<1x8x128xf32>
    %54 = vector.shape_cast %53 : vector<1x8x128xf32> to vector<8x128xf32>
    %55 = arith.mulf %50, %54 : vector<8x128xf32>
    %56 = arith.addf %52, %55 : vector<8x128xf32>
    %c0_40 = arith.constant 0 : index
    %c0_41 = arith.constant 0 : index
    %c0_42 = arith.constant 0 : index
    %c0_43 = arith.constant 0 : index
    %57 = vector.load %arg6[%c0_40, %c0_41, %c0_42, %c0_43] : memref<1x1x8x128xf32, #tpu.memory_space<vmem>>, vector<1x1x8x128xf32>
    %58 = vector.shape_cast %57 : vector<1x1x8x128xf32> to vector<8x128xf32>
    %59 = vector.shape_cast %56 : vector<8x128xf32> to vector<1x1x8x128xf32>
    tpu.vector_store %arg6[%c0_40, %c0_41, %c0_42, %c0_43], %59 {strides = array<i32>} : memref<1x1x8x128xf32, #tpu.memory_space<vmem>>, vector<1x1x8x128xf32>,
    return
  }
  func.func @transform_0(%arg0: i32, %arg1: i32, %arg2: i32) -> (i32, i32, i32, i32) {
    %c1_i32 = arith.constant 1 : i32
    %0 = arith.muli %arg1, %c1_i32 : i32
    %1 = arith.addi %0, %arg2 : i32
    %c0_i32 = arith.constant 0 : i32
    %c0_i32_0 = arith.constant 0 : i32
    %c0_i32_1 = arith.constant 0 : i32
    return %arg0, %c0_i32, %1, %c0_i32_0 : i32, i32, i32, i32
  }
  func.func @transform_1(%arg0: i32, %arg1: i32, %arg2: i32) -> (i32, i32, i32) {
    %c1_i32 = arith.constant 1 : i32
    %0 = arith.muli %arg1, %c1_i32 : i32
    %1 = arith.addi %0, %arg2 : i32
    %c0_i32 = arith.constant 0 : i32
    %c0_i32_0 = arith.constant 0 : i32
    return %arg0, %1, %c0_i32 : i32, i32, i32
  }
  func.func @transform_2(%arg0: i32, %arg1: i32, %arg2: i32) -> (i32, i32, i32) {
    %c1_i32 = arith.constant 1 : i32
    %0 = arith.muli %arg1, %c1_i32 : i32
    %1 = arith.addi %0, %arg2 : i32
    %c0_i32 = arith.constant 0 : i32
    %c0_i32_0 = arith.constant 0 : i32
    return %arg0, %1, %c0_i32 : i32, i32, i32
  }
  func.func @transform_3(%arg0: i32, %arg1: i32, %arg2: i32) -> (i32, i32, i32, i32) {
    %c0_i32 = arith.constant 0 : i32
    %c0_i32_0 = arith.constant 0 : i32
    %c0_i32_1 = arith.constant 0 : i32
    return %arg0, %arg1, %c0_i32, %c0_i32_0 : i32, i32, i32, i32
  }
}

</mosaic_0001>

<llo_original>
// kernel: tpu_custom_call.1
$region0: #{tpu_custom_call.1}
  #allocation0 [shape = 'u32[]', space=smem, size = 0x4, offset = 0x4, fixed_abs, tag = 'smem constant byte address 0x4 - core index']
  #allocation1 [shape = 'u32[144,128]{1,0:T(1,128)}', space=vmem, size = 0x12000, scoped, tag = 'internal scratch']
  %s0 = inlined_call_operand.hbm [shape: f32[2,4,8,128], index: 0, kind: input, shape index: {}]
  %s1 = inlined_call_operand.hbm [shape: s32[2,8,128], index: 1, kind: input, shape index: {}]
  %s2 = inlined_call_operand.hbm [shape: f32[2,8,128], index: 2, kind: input, shape index: {}]
  %s3 = inlined_call_operand.hbm [shape: f32[2,1,8,128], index: 3, kind: output, shape index: {}]
  %s4 = sld [smem:[#allocation0]]
  $region61: #{tpu_custom_call.1} parent=0
    _
  %s6 = ssub.s32 1, %s4
  %s7 = scalar_select 0, %s6, %s4
  $region1: #{tpu_custom_call.1} parent=0
    #allocation2 [shape = 'u8[32768]{0}', space=vmem, size = 0x8000, scoped, tag = 'input window, operand 0']
    #allocation3 [shape = 's32[2]{0}', space=sflag, size = 0x8, scoped, tag = 'scoped memory for tpu_custom_call.1']
    #allocation4 [shape = 's32[2]{0}', space=sflag, size = 0x8, scoped, tag = 'scoped memory for tpu_custom_call.1']
    #allocation5 [shape = 'u8[8192]{0}', space=vmem, size = 0x2000, scoped, tag = 'input window, operand 1']
    #allocation6 [shape = 's32[2]{0}', space=sflag, size = 0x8, scoped, tag = 'scoped memory for tpu_custom_call.1']
    #allocation7 [shape = 'u8[8192]{0}', space=vmem, size = 0x2000, scoped, tag = 'input window, operand 2']
    #allocation8 [shape = 'u8[8192]{0}', space=vmem, size = 0x2000, scoped, tag = 'output window, operand 0']
    %8 = vsyncpa [#allocation3], 0
    %s9 = scalar_lea.sflag [#allocation3], 1
    %10 = vsyncpa %s9, 0
    %11 = vsyncpa [#allocation6], 0
    %s12 = scalar_lea.sflag [#allocation6], 1
    %13 = vsyncpa %s12, 0
    %14 = vsyncpa [#allocation4], 0
    %s15 = scalar_lea.sflag [#allocation4], 1
    %16 = vsyncpa %s15, 0
    loop: start=0, step=1, limit=4
    $region2: #{tpu_custom_call.1} parent=1 // loop_pre_header
      _
    $region3: #{tpu_custom_call.1} parent=1 // loop_header
      %s18 = sphi 0, %s22
      %p19 = scmp.ge.s32.totalorder %s18, 4
      %s25 = sphi 0, %s44
      %s26 = sphi 0, %s40
      %s27 = sphi 0, %s36
      %s28 = sphi 0, %s25
      %s29 = sphi 0, %s26
      %s30 = sphi 0, %s27
      %s31 = sphi 0, %s28
      %s32 = sphi 0, %s29
      %s33 = sphi 0, %s30
      %s51 = sphi 0, %s53
      %s54 = sphi 0, %s51
      %s55 = sphi 0, %s54
      %s71 = sphi 0, %s55
      %s81 = sphi 0, %s83
      %s84 = sphi 0, %s81
      %s85 = sphi 0, %s84
      %s101 = sphi 0, %s85
      %s111 = sphi 0, %s113
      %s114 = sphi 0, %s111
      %s115 = sphi 0, %s114
      %s131 = sphi 0, %s115
      %s139 = sphi 0, %s141
      %s142 = sphi 0, %s139
      %s143 = sphi 0, %s142
      %s159 = sphi 0, %s143
    $region4: #{tpu_custom_call.1} parent=1 // loop_header_branch
      %21 = sbr.rel (%p19) target = $region8
    $region5: #{tpu_custom_call.1} parent=1 // loop_body
      %s23 = ssub.s32 %s18, 1
      %s24 = ssub.s32 %s18, 2
      %s34 = sadd.s32 1, %s27
      %p35 = scmp.ge.s32.totalorder %s34, 1
      %s36 = scalar_select %p35, 0, %s34
      %s37 = sadd.s32 1, %s26
      %s38 = scalar_select %p35, %s37, %s26
      %p39 = scmp.ge.s32.totalorder %s38, 1
      %s40 = scalar_select %p39, 0, %s38
      %s41 = sadd.s32 1, %s25
      %s42 = scalar_select %p39, %s41, %s25
      %p43 = scmp.ge.s32.totalorder %s42, 2
      %s44 = scalar_select %p43, 0, %s42
      %s45 = sadd.s32 %s26, %s27
      %s46 = sadd.s32 %s40, %s36
      %s47 = ssub.s32 %s25, %s44
      %s48 = ssub.s32 %s45, %s46
      %s49 = sor.u32 %s47, %s48
      %p50 = scmp.eq.s32.totalorder %s49, 0
      %s52 = sadd.s32 %s51, 1
      %s53 = scalar_select %p50, %s51, %s52
      %p56 = pneg %p50
      %p57 = scmp.eq.s32.totalorder %s18, 1
      %p58 = por %p56, %p57
      %p59 = scmp.ne.s32.totalorder %s51, %s54
      %p60 = scmp.eq.s32.totalorder %s18, 0
      %p61 = por %p59, %p60
      %p62 = scmp.ne.s32.totalorder %s51, %s54
      %p63 = scmp.eq.s32.totalorder %s23, 1
      %p64 = por %p62, %p63
      %p65 = scmp.ne.s32.totalorder %s54, %s55
      %p66 = scmp.eq.s32.totalorder %s23, 0
      %p67 = por %p65, %p66
      %p68 = scmp.ne.s32.totalorder %s54, %s55
      %p69 = scmp.eq.s32.totalorder %s24, 1
      %p70 = por %p68, %p69
      %p72 = scmp.ne.s32.totalorder %s55, %s71
      %p73 = scmp.eq.s32.totalorder %s24, 0
      %p74 = por %p72, %p73
      %s75 = sadd.s32 %s26, %s27
      %s76 = sadd.s32 %s40, %s36
      %s77 = ssub.s32 %s25, %s44
      %s78 = ssub.s32 %s75, %s76
      %s79 = sor.u32 %s77, %s78
      %p80 = scmp.eq.s32.totalorder %s79, 0
      %s82 = sadd.s32 %s81, 1
      %s83 = scalar_select %p80, %s81, %s82
      %p86 = pneg %p80
      %p87 = scmp.eq.s32.totalorder %s18, 1
      %p88 = por %p86, %p87
      %p89 = scmp.ne.s32.totalorder %s81, %s84
      %p90 = scmp.eq.s32.totalorder %s18, 0
      %p91 = por %p89, %p90
      %p92 = scmp.ne.s32.totalorder %s81, %s84
      %p93 = scmp.eq.s32.totalorder %s23, 1
      %p94 = por %p92, %p93
      %p95 = scmp.ne.s32.totalorder %s84, %s85
      %p96 = scmp.eq.s32.totalorder %s23, 0
      %p97 = por %p95, %p96
      %p98 = scmp.ne.s32.totalorder %s84, %s85
      %p99 = scmp.eq.s32.totalorder %s24, 1
      %p100 = por %p98, %p99
      %p102 = scmp.ne.s32.totalorder %s85, %s101
      %p103 = scmp.eq.s32.totalorder %s24, 0
      %p104 = por %p102, %p103
      %s105 = sadd.s32 %s26, %s27
      %s106 = sadd.s32 %s40, %s36
      %s107 = ssub.s32 %s25, %s44
      %s108 = ssub.s32 %s105, %s106
      %s109 = sor.u32 %s107, %s108
      %p110 = scmp.eq.s32.totalorder %s109, 0
      %s112 = sadd.s32 %s111, 1
      %s113 = scalar_select %p110, %s111, %s112
      %p116 = pneg %p110
      %p117 = scmp.eq.s32.totalorder %s18, 1
      %p118 = por %p116, %p117
      %p119 = scmp.ne.s32.totalorder %s111, %s114
      %p120 = scmp.eq.s32.totalorder %s18, 0
      %p121 = por %p119, %p120
      %p122 = scmp.ne.s32.totalorder %s111, %s114
      %p123 = scmp.eq.s32.totalorder %s23, 1
      %p124 = por %p122, %p123
      %p125 = scmp.ne.s32.totalorder %s114, %s115
      %p126 = scmp.eq.s32.totalorder %s23, 0
      %p127 = por %p125, %p126
      %p128 = scmp.ne.s32.totalorder %s114, %s115
      %p129 = scmp.eq.s32.totalorder %s24, 1
      %p130 = por %p128, %p129
      %p132 = scmp.ne.s32.totalorder %s115, %s131
      %p133 = scmp.eq.s32.totalorder %s24, 0
      %p134 = por %p132, %p133
      %s135 = ssub.s32 %s25, %s44
      %s136 = ssub.s32 %s26, %s40
      %s137 = sor.u32 %s135, %s136
      %p138 = scmp.eq.s32.totalorder %s137, 0
      %s140 = sadd.s32 %s139, 1
      %s141 = scalar_select %p138, %s139, %s140
      %p144 = pneg %p138
      %p145 = scmp.eq.s32.totalorder %s18, 1
      %p146 = por %p144, %p145
      %p147 = scmp.ne.s32.totalorder %s139, %s142
      %p148 = scmp.eq.s32.totalorder %s18, 0
      %p149 = por %p147, %p148
      %p150 = scmp.ne.s32.totalorder %s139, %s142
      %p151 = scmp.eq.s32.totalorder %s23, 1
      %p152 = por %p150, %p151
      %p153 = scmp.ne.s32.totalorder %s142, %s143
      %p154 = scmp.eq.s32.totalorder %s23, 0
      %p155 = por %p153, %p154
      %p156 = scmp.ne.s32.totalorder %s142, %s143
      %p157 = scmp.eq.s32.totalorder %s24, 1
      %p158 = por %p156, %p157
      %p160 = scmp.ne.s32.totalorder %s143, %s159
      %p161 = scmp.eq.s32.totalorder %s24, 0
      %p162 = por %p160, %p161
      %p163 = scmp.le.s32.totalorder 1, %s18
      %p164 = scmp.lt.s32.totalorder %s18, 3
      %p165 = pnand %p163, %p164
      %p166 = pneg %p165
      // Predicated region
      $region9: #{tpu_custom_call.1} parent=5 // pred_check
        _
      $region10: #{tpu_custom_call.1} parent=5 // pred_check_branch
        %168 = sbr.rel (%p165) target = $region12
      $region11: #{tpu_custom_call.1} parent=5 // pred_region
        %s169 = ssub.s32 %s18, 1
      $region12: #{tpu_custom_call.1} parent=5 // pred_fallthru
        _
      %p170 = scmp.lt.s32.totalorder %s18, 2
      // Predicated region
      $region13: #{tpu_custom_call.1} parent=5 // pred_check
        %p171 = pneg %p170
      $region14: #{tpu_custom_call.1} parent=5 // pred_check_branch
        %173 = sbr.rel (%p171) target = $region16
      $region15: #{tpu_custom_call.1} parent=5 // pred_region
        // Predicated region
        $region17: #{tpu_custom_call.1} parent=15 // pred_check
          %p174 = pneg %p61
        $region18: #{tpu_custom_call.1} parent=15 // pred_check_branch
          %176 = sbr.rel (%p174) target = $region20
        $region19: #{tpu_custom_call.1} parent=15 // pred_region
          %s177 = sand.u32 %s51, 1
          %s178 = scalar_lea.sflag [#allocation3], %s177
          %s179 = sand.u32 %s51, 1
          %s180 = smul.addr %s179, 32
          %s181 = scalar_lea.vmem [#allocation2], %s180
          %s182 = sadd.s32 %s26, %s27
          %s184 = ssub.s32 512, 512
          %185 = vsyncadd %s178, %s184
          %s186 = smul.addr %s25, 4
          %s187 = sadd.s32 %s182, %s186
          %s188 = smul.addr %s187, 128
          %s189 = scalar_lea.hbm %s0, %s188
          %s190 = sshll.u32 %s181, 4
          %s191 = int_to_ptr.vmem [resolvable:$true] %s190
          %196 = dma.hbm_to_vmem [thread:$0]  %s189, 512, %s191, %s178, 128, 128, 8
        $region20: #{tpu_custom_call.1} parent=15 // pred_fallthru
          _
        // Predicated region
        $region21: #{tpu_custom_call.1} parent=15 // pred_check
          %p197 = pneg %p91
        $region22: #{tpu_custom_call.1} parent=15 // pred_check_branch
          %199 = sbr.rel (%p197) target = $region24
        $region23: #{tpu_custom_call.1} parent=15 // pred_region
          %s200 = sand.u32 %s18, 1
          %s201 = scalar_lea.sflag [#allocation6], %s200
          %s202 = sand.u32 %s81, 1
          %s203 = smul.addr %s202, 8
          %s204 = scalar_lea.vmem [#allocation5], %s203
          %s205 = sadd.s32 %s26, %s27
          %s207 = ssub.s32 128, 128
          %208 = vsyncadd %s201, %s207
          %s209 = sadd.s32 %s205, %s25
          %s210 = smul.addr %s209, 128
          %s211 = scalar_lea.hbm %s1, %s210
          %s213 = sshll.u32 %s204, 4
          %s214 = int_to_ptr.vmem [resolvable:$true] %s213
          %216 = dma.hbm_to_vmem [thread:$0]  %s211, 128, %s214, %s201
        $region24: #{tpu_custom_call.1} parent=15 // pred_fallthru
          _
        // Predicated region
        $region25: #{tpu_custom_call.1} parent=15 // pred_check
          %p217 = pneg %p121
        $region26: #{tpu_custom_call.1} parent=15 // pred_check_branch
          %219 = sbr.rel (%p217) target = $region28
        $region27: #{tpu_custom_call.1} parent=15 // pred_region
          %s220 = sand.u32 %s18, 1
          %s221 = scalar_lea.sflag [#allocation6], %s220
          %s222 = sand.u32 %s111, 1
          %s223 = smul.addr %s222, 8
          %s224 = scalar_lea.vmem [#allocation7], %s223
          %s225 = sadd.s32 %s26, %s27
          %s227 = ssub.s32 128, 128
          %228 = vsyncadd %s221, %s227
          %s229 = sadd.s32 %s225, %s25
          %s230 = smul.addr %s229, 128
          %s231 = scalar_lea.hbm %s2, %s230
          %s233 = sshll.u32 %s224, 4
          %s234 = int_to_ptr.vmem [resolvable:$true] %s233
          %236 = dma.hbm_to_vmem [thread:$0]  %s231, 128, %s234, %s221
        $region28: #{tpu_custom_call.1} parent=15 // pred_fallthru
          _
      $region16: #{tpu_custom_call.1} parent=5 // pred_fallthru
        _
      %p237 = scmp.le.s32.totalorder 1, %s18
      %p238 = scmp.lt.s32.totalorder %s18, 3
      %p239 = pnand %p237, %p238
      %p240 = pneg %p239
      // Predicated region
      $region29: #{tpu_custom_call.1} parent=5 // pred_check
        _
      $region30: #{tpu_custom_call.1} parent=5 // pred_check_branch
        %242 = sbr.rel (%p239) target = $region32
      $region31: #{tpu_custom_call.1} parent=5 // pred_region
        %s243 = ssub.s32 %s18, 1
        %s244 = sand.u32 %s54, 1
        %s245 = scalar_lea.sflag [#allocation3], %s244
        %s246 = sand.u32 %s54, 1
        %s247 = smul.addr %s246, 32
        %s248 = scalar_lea.vmem [#allocation2], %s247
        // Predicated region
        $region33: #{tpu_custom_call.1} parent=31 // pred_check
          %p249 = pneg %p67
        $region34: #{tpu_custom_call.1} parent=31 // pred_check_branch
          %251 = sbr.rel (%p249) target = $region36
        $region35: #{tpu_custom_call.1} parent=31 // pred_region
          %252 = dma.done %s245, 512
        $region36: #{tpu_custom_call.1} parent=31 // pred_fallthru
          _
        %s253 = sand.u32 %s23, 1
        %s254 = scalar_lea.sflag [#allocation6], %s253
        %s255 = sand.u32 %s84, 1
        %s256 = smul.addr %s255, 8
        %s257 = scalar_lea.vmem [#allocation5], %s256
        // Predicated region
        $region37: #{tpu_custom_call.1} parent=31 // pred_check
          %p258 = pneg %p97
        $region38: #{tpu_custom_call.1} parent=31 // pred_check_branch
          %260 = sbr.rel (%p258) target = $region40
        $region39: #{tpu_custom_call.1} parent=31 // pred_region
          %261 = dma.done %s254, 128
        $region40: #{tpu_custom_call.1} parent=31 // pred_fallthru
          _
        %s262 = sand.u32 %s23, 1
        %s263 = scalar_lea.sflag [#allocation6], %s262
        %s264 = sand.u32 %s114, 1
        %s265 = smul.addr %s264, 8
        %s266 = scalar_lea.vmem [#allocation7], %s265
        // Predicated region
        $region41: #{tpu_custom_call.1} parent=31 // pred_check
          %p267 = pneg %p127
        $region42: #{tpu_custom_call.1} parent=31 // pred_check_branch
          %269 = sbr.rel (%p267) target = $region44
        $region43: #{tpu_custom_call.1} parent=31 // pred_region
          %270 = dma.done %s263, 128
        $region44: #{tpu_custom_call.1} parent=31 // pred_fallthru
          _
        %s271 = sand.u32 %s54, 1
        %s272 = scalar_lea.sflag [#allocation3], %s271
        %s273 = sand.u32 %s54, 1
        %s274 = smul.addr %s273, 32
        %s275 = scalar_lea.vmem [#allocation2], %s274
        %p276 = pneg %p67
        %p277 = pneg %p64
        %s278 = sand.u32 %s23, 1
        %s279 = scalar_lea.sflag [#allocation6], %s278
        %s280 = sand.u32 %s84, 1
        %s281 = smul.addr %s280, 8
        %s282 = scalar_lea.vmem [#allocation5], %s281
        %p283 = pneg %p97
        %p284 = pneg %p94
        %s285 = sand.u32 %s23, 1
        %s286 = scalar_lea.sflag [#allocation6], %s285
        %s287 = sand.u32 %s114, 1
        %s288 = smul.addr %s287, 8
        %s289 = scalar_lea.vmem [#allocation7], %s288
        %p290 = pneg %p127
        %p291 = pneg %p124
        %p292 = pneg %p155
        %p293 = pneg %p152
        %s294 = sand.u32 %s142, 1
        %s295 = scalar_lea.sflag [#allocation4], %s294
        %s296 = sand.u32 %s142, 1
        %s297 = smul.addr %s296, 8
        %s298 = scalar_lea.vmem [#allocation8], %s297
        %s299 = sadd.s32 %s29, %s30
        %s300 = sadd.s32 %s29, %s30
        %s301 = sadd.s32 %s29, %s30
        %p302 = scmp.eq.s32.totalorder %s30, 0
        // Predicated region
        $region45: #{tpu_custom_call.1} parent=31 // pred_check
          %p303 = pneg %p302
        $region46: #{tpu_custom_call.1} parent=31 // pred_check_branch
          %305 = sbr.rel (%p303) target = $region48
        $region47: #{tpu_custom_call.1} parent=31 // pred_region
          %306 = vst [vmem:[%s298] sm:$0xff] 0.0
        $region48: #{tpu_custom_call.1} parent=31 // pred_fallthru
          _
        %v307 = vld [vmem:[%s257] sm:$0xff]
        %v308 = vld [vmem:[%s248] sm:$0xff]
        %vm309 = vcmp.eq.s32.totalorder %v307, 0
        %v310 = vsel %vm309, %v308, 0.0
        %s311 = scalar_lea.vmem %s248, 8 [#allocation2]
        %v312 = vld [vmem:[%s311] sm:$0xff]
        %v313 = vmax.f32 %v308, %v312
        %vm314 = vcmp.eq.s32.totalorder %v307, 1
        %v315 = vsel %vm314, %v312, %v310
        %s316 = scalar_lea.vmem %s248, 16 [#allocation2]
        %v317 = vld [vmem:[%s316] sm:$0xff]
        %v318 = vmax.f32 %v313, %v317
        %vm319 = vcmp.eq.s32.totalorder %v307, 2
        %v320 = vsel %vm319, %v317, %v315
        %s321 = scalar_lea.vmem %s248, 24 [#allocation2]
        %v322 = vld [vmem:[%s321] sm:$0xff]
        %v323 = vmax.f32 %v318, %v322
        %vm324 = vcmp.eq.s32.totalorder %v307, 3
        %v325 = vsel %vm324, %v322, %v320
        %v326 = vsub.f32 %v308, %v323
        %v327 = vmul.f32 %v326, 1.442695
        %v328 = vpow.pop %v327
        %v329 = vsub.f32 %v312, %v323
        %v330 = vmul.f32 %v329, 1.442695
        %v331 = vpow.pop %v330
        %v332 = vadd.f32 %v328, %v331
        %v333 = vsub.f32 %v317, %v323
        %v334 = vmul.f32 %v333, 1.442695
        %v335 = vpow.pop %v334
        %v336 = vadd.f32 %v332, %v335
        %v337 = vsub.f32 %v322, %v323
        %v338 = vmul.f32 %v337, 1.442695
        %v339 = vpow.pop %v338
        %v340 = vadd.f32 %v336, %v339
        %v341 = vlog2.pop %v340
        %v342 = vmul.f32 %v341, 0.6931472
        %v343 = vadd.f32 %v342, %v323
        %v344 = vsub.f32 %v343, %v325
        %v345 = vld [vmem:[%s298] sm:$0xff]
        %v346 = vld [vmem:[%s266] sm:$0xff]
        %v347 = vmul.f32 %v344, %v346
        %v348 = vadd.f32 %v345, %v347
        %349 = vst [vmem:[%s298] sm:$0xff] %v348
        %s350 = sand.u32 %s142, 1
        %s351 = scalar_lea.sflag [#allocation4], %s350
        %s352 = sand.u32 %s142, 1
        %s353 = smul.addr %s352, 8
        %s354 = scalar_lea.vmem [#allocation8], %s353
        // Predicated region
        $region49: #{tpu_custom_call.1} parent=31 // pred_check
          %p355 = pneg %p152
        $region50: #{tpu_custom_call.1} parent=31 // pred_check_branch
          %357 = sbr.rel (%p355) target = $region52
        $region51: #{tpu_custom_call.1} parent=31 // pred_region
          %s359 = ssub.s32 128, 128
          %360 = vsyncadd %s351, %s359
          %s361 = sadd.s32 %s29, %s28
          %s362 = smul.addr %s361, 128
          %s363 = scalar_lea.hbm %s3, %s362
          %s365 = sshll.u32 %s354, 4
          %s366 = int_to_ptr.vmem [resolvable:$true] %s365
          %368 = dma.vmem_to_hbm [thread:$0]  %s366, 128, %s363, %s351
        $region52: #{tpu_custom_call.1} parent=31 // pred_fallthru
          _
      $region32: #{tpu_custom_call.1} parent=5 // pred_fallthru
        _
      %p369 = scmp.le.s32.totalorder 2, %s18
      // Predicated region
      $region53: #{tpu_custom_call.1} parent=5 // pred_check
        %p370 = pneg %p369
      $region54: #{tpu_custom_call.1} parent=5 // pred_check_branch
        %372 = sbr.rel (%p370) target = $region56
      $region55: #{tpu_custom_call.1} parent=5 // pred_region
        %s373 = ssub.s32 %s18, 2
        // Predicated region
        $region57: #{tpu_custom_call.1} parent=55 // pred_check
          %p374 = pneg %p158
        $region58: #{tpu_custom_call.1} parent=55 // pred_check_branch
          %376 = sbr.rel (%p374) target = $region60
        $region59: #{tpu_custom_call.1} parent=55 // pred_region
          %s377 = sand.u32 %s143, 1
          %s378 = scalar_lea.sflag [#allocation4], %s377
          %s379 = sand.u32 %s143, 1
          %s380 = smul.addr %s379, 8
          %s381 = scalar_lea.vmem [#allocation8], %s380
          %382 = dma.done %s378, 128
        $region60: #{tpu_custom_call.1} parent=55 // pred_fallthru
          _
      $region56: #{tpu_custom_call.1} parent=5 // pred_fallthru
        _
    $region6: #{tpu_custom_call.1} parent=1 // loop_footer
      %s22 = sadd.s32 1, %s18
    $region7: #{tpu_custom_call.1} parent=1 // loop_footer_branch
      %17 = sbr.rel target = $region3
    $region8: #{tpu_custom_call.1} parent=1 // loop_exit
      _
    %383 = vsyncpa [#allocation3], 1
    %s384 = scalar_lea.sflag [#allocation3], 1
    %385 = vsyncpa %s384, 1
    %386 = vsyncpa [#allocation6], 1
    %s387 = scalar_lea.sflag [#allocation6], 1
    %388 = vsyncpa %s387, 1
    %389 = vsyncpa [#allocation4], 1
    %s390 = scalar_lea.sflag [#allocation4], 1
    %391 = vsyncpa %s390, 1

</llo_original>
